<compile_context>
chip_gen: v7x
topology: tpu7x:2x2x1
jax: 0.10.0
libtpu: 0.0.40
codegen_flags: <defaults>
</compile_context>

<pallas_src>
import jax
import jax.numpy as jnp
from jax.experimental import pallas as pl
from jax.experimental.pallas import tpu as pltpu


def _round_up(x, m):
    return ((x + m - 1) // m) * m


def mlp_kernel(x_ref, w1_ref, b1_ref, w2_ref, b2_ref, o_ref):
    # Layer 1: Linear + ReLU.
    # bf16 operands -> MXU fast path on all generations; f32 accumulation.
    x = x_ref[...].astype(jnp.bfloat16)
    w1 = w1_ref[...].astype(jnp.bfloat16)
    h = jnp.dot(x, w1, preferred_element_type=jnp.float32)
    # Bias add + ReLU in f32 on the VPU (v5e has no bf16 VPU path).
    h = jnp.maximum(h + b1_ref[...], 0.0)

    # Layer 2: Linear (output lane dim is padded to a multiple of 128 by the
    # wrapper, so this store is lane-dense / unmasked).
    w2 = w2_ref[...].astype(jnp.bfloat16)
    y = jnp.dot(h.astype(jnp.bfloat16), w2, preferred_element_type=jnp.float32)
    y = y + b2_ref[...]
    o_ref[...] = y.astype(o_ref.dtype)


def neural_network_forward(x, w1, b1, w2, b2, *, batch_tile=512):
    """Fused Sequential(Linear, ReLU, Linear) forward, batch-tiled.

    x:  (B, in_features)
    w1: (in_features, hidden),  b1: (1, hidden)
    w2: (hidden, out_features), b2: (1, out_features)
    Returns (B, out_features).
    """
    B, f_in = x.shape
    hidden = w1.shape[1]
    f_out = w2.shape[1]
    dtype = x.dtype

    # --- Pad the output feature dim to a lane-dense multiple of 128. ---
    n_pad = max(128, _round_up(f_out, 128))
    if n_pad != f_out:
        w2p = jnp.pad(w2, ((0, 0), (0, n_pad - f_out)))
        b2p = jnp.pad(b2, ((0, 0), (0, n_pad - f_out)))
    else:
        w2p, b2p = w2, b2

    # --- Pick a batch tile and pad the batch to a multiple of it. ---
    # batch_tile=512 keeps the double-buffered x/y tiles + the (TB, hidden)
    # f32 intermediate comfortably inside v7x's 64 MiB VMEM for typical MLP
    # widths, while being big enough to amortize the ~0.35 us per-step cost.
    tb = min(batch_tile, _round_up(B, 8))
    b_pad = _round_up(B, tb)
    if b_pad != B:
        xp = jnp.pad(x, ((0, b_pad - B), (0, 0)))
    else:
        xp = x
    grid = (b_pad // tb,)

    itemsize = jnp.dtype(dtype).itemsize
    cost = pl.CostEstimate(
        flops=2 * b_pad * (f_in * hidden + hidden * n_pad),
        transcendentals=0,
        bytes_accessed=(
            b_pad * f_in * itemsize          # x in
            + f_in * hidden * 4              # W1
            + hidden * 4                     # b1
            + hidden * n_pad * 4             # W2
            + n_pad * 4                      # b2
            + b_pad * n_pad * itemsize       # y out
        ),
    )

    out = pl.pallas_call(
        mlp_kernel,
        out_shape=jax.ShapeDtypeStruct((b_pad, n_pad), dtype),
        grid=grid,
        in_specs=[
            # x: tiled over the batch grid (double-buffered by Pallas).
            pl.BlockSpec((tb, f_in), lambda i: (i, 0)),
            # Weights / biases: same block every step -> DMA'd once, resident.
            pl.BlockSpec((f_in, hidden), lambda i: (0, 0)),
            pl.BlockSpec((1, hidden), lambda i: (0, 0)),
            pl.BlockSpec((hidden, n_pad), lambda i: (0, 0)),
            pl.BlockSpec((1, n_pad), lambda i: (0, 0)),
        ],
        out_specs=pl.BlockSpec((tb, n_pad), lambda i: (i, 0)),
        compiler_params=pltpu.CompilerParams(
            # Batch tiles are independent -> shard across v7x's 2 TensorCores.
            dimension_semantics=("parallel",),
            # Explicit scoped-VMEM budget (well within 64 MiB on v7x).
            vmem_limit_bytes=48 * 1024 * 1024,
        ),
        cost_estimate=cost,
    )(xp, w1, b1, w2p, b2p)

    return out[:B, :f_out]


def init_params(key, in_features, hidden, out_features, dtype=jnp.float32):
    """Deterministic init mimicking torch.nn.Linear's U(-1/sqrt(fan_in), ...)."""
    k1, k2, k3, k4 = jax.random.split(key, 4)
    bound1 = 1.0 / (in_features ** 0.5)
    bound2 = 1.0 / (hidden ** 0.5)
    w1 = jax.random.uniform(k1, (in_features, hidden), dtype, -bound1, bound1)
    b1 = jax.random.uniform(k2, (1, hidden), dtype, -bound1, bound1)
    w2 = jax.random.uniform(k3, (hidden, out_features), dtype, -bound2, bound2)
    b2 = jax.random.uniform(k4, (1, out_features), dtype, -bound2, bound2)
    return w1, b1, w2, b2


def _reference(x, w1, b1, w2, b2):
    return jnp.maximum(x @ w1 + b1, 0.0) @ w2 + b2


if __name__ == "__main__":
    key = jax.random.PRNGKey(0)
    k_x, k_x2, k_p = jax.random.split(key, 3)

    # Small shapes consistent with a Sequential MLP forward:
    # batch=8, in_features=32, hidden=64, out_features=4
    batch, in_features, hidden, out_features = 8, 32, 64, 4
    w1, b1, w2, b2 = init_params(k_p, in_features, hidden, out_features)

    x = jax.random.normal(k_x, (batch, in_features), jnp.float32)
    y = jax.block_until_ready(neural_network_forward(x, w1, b1, w2, b2))
    ref = _reference(x, w1, b1, w2, b2)
    assert y.shape == (batch, out_features)
    # bf16 MXU operands with f32 accumulation -> loosened tolerance (expected).
    assert jnp.allclose(y, ref, atol=5e-2, rtol=5e-2)

    # Exercise the batch grid / padding path with a non-multiple batch.
    batch2 = 300
    x2 = jax.random.normal(k_x2, (batch2, in_features), jnp.float32)
    y2 = jax.block_until_ready(
        neural_network_forward(x2, w1, b1, w2, b2, batch_tile=128))
    ref2 = _reference(x2, w1, b1, w2, b2)
    assert y2.shape == (batch2, out_features)
    assert jnp.allclose(y2, ref2, atol=5e-2, rtol=5e-2)

    print("KERNEL_OK")
</pallas_src>

<mosaic_0001>
module attributes {stable_mosaic.version = 11 : i64} {
  func.func @mlp_kernel(%arg0: i32, %arg1: memref<8x32xf32, #tpu.memory_space<vmem>>, %arg2: memref<32x64xf32, #tpu.memory_space<vmem>>, %arg3: memref<1x64xf32, #tpu.memory_space<vmem>>, %arg4: memref<64x128xf32, #tpu.memory_space<vmem>>, %arg5: memref<1x128xf32, #tpu.memory_space<vmem>>, %arg6: memref<8x128xf32, #tpu.memory_space<vmem>>) attributes {dimension_semantics = [#tpu.dimension_semantics<parallel>], iteration_bounds = array<i64: 1>, scalar_prefetch = 0 : i64, scratch_operands = 0 : i64, tpu.core_type = #tpu.core_type<tc>, window_params = [{transform_indices = @transform_0, window_bounds = array<i64: 8, 32>}, {pipeline_mode = #tpu.pipeline_mode<synchronous>, transform_indices = @transform_1, window_bounds = array<i64: 32, 64>}, {pipeline_mode = #tpu.pipeline_mode<synchronous>, transform_indices = @transform_2, window_bounds = array<i64: 1, 64>}, {pipeline_mode = #tpu.pipeline_mode<synchronous>, transform_indices = @transform_3, window_bounds = array<i64: 64, 128>}, {pipeline_mode = #tpu.pipeline_mode<synchronous>, transform_indices = @transform_4, window_bounds = array<i64: 1, 128>}, {transform_indices = @transform_5, window_bounds = array<i64: 8, 128>}]} {
    %c0 = arith.constant 0 : index
    %c0_0 = arith.constant 0 : index
    %0 = vector.load %arg1[%c0, %c0_0] : memref<8x32xf32, #tpu.memory_space<vmem>>, vector<8x32xf32>
    %1 = arith.truncf %0 : vector<8x32xf32> to vector<8x32xbf16>
    %c0_1 = arith.constant 0 : index
    %c0_2 = arith.constant 0 : index
    %2 = vector.load %arg2[%c0_1, %c0_2] : memref<32x64xf32, #tpu.memory_space<vmem>>, vector<32x64xf32>
    %3 = arith.truncf %2 : vector<32x64xf32> to vector<32x64xbf16>
    %cst = arith.constant dense<0.000000e+00> : vector<8x64xf32>
    %4 = tpu.matmul %1, %3, %cst {dimension_numbers = #tpu.dot_dimension_numbers<[1], [0], [0], [1], [0, 0, 1, 1], [], []>} : vector<8x32xbf16>, vector<32x64xbf16>, vector<8x64xf32> -> vector<8x64xf32>
    %c0_3 = arith.constant 0 : index
    %c0_4 = arith.constant 0 : index
    %5 = vector.load %arg3[%c0_3, %c0_4] : memref<1x64xf32, #tpu.memory_space<vmem>>, vector<1x64xf32>
    %6 = vector.broadcast %5 : vector<1x64xf32> to vector<8x64xf32>
    %7 = arith.addf %4, %6 : vector<8x64xf32>
    %cst_5 = arith.constant 0.000000e+00 : f32
    %8 = vector.broadcast %cst_5 : f32 to vector<8x64xf32>
    %9 = arith.maximumf %7, %8 : vector<8x64xf32>
    %c0_6 = arith.constant 0 : index
    %c0_7 = arith.constant 0 : index
    %10 = vector.load %arg4[%c0_6, %c0_7] : memref<64x128xf32, #tpu.memory_space<vmem>>, vector<64x128xf32>
    %11 = arith.truncf %10 : vector<64x128xf32> to vector<64x128xbf16>
    %12 = arith.truncf %9 : vector<8x64xf32> to vector<8x64xbf16>
    %cst_8 = arith.constant dense<0.000000e+00> : vector<8x128xf32>
    %13 = tpu.matmul %12, %11, %cst_8 {dimension_numbers = #tpu.dot_dimension_numbers<[1], [0], [0], [1], [0, 0, 1, 1], [], []>} : vector<8x64xbf16>, vector<64x128xbf16>, vector<8x128xf32> -> vector<8x128xf32>
    %c0_9 = arith.constant 0 : index
    %c0_10 = arith.constant 0 : index
    %14 = vector.load %arg5[%c0_9, %c0_10] : memref<1x128xf32, #tpu.memory_space<vmem>>, vector<1x128xf32>
    %15 = vector.broadcast %14 : vector<1x128xf32> to vector<8x128xf32>
    %16 = arith.addf %13, %15 : vector<8x128xf32>
    %c0_11 = arith.constant 0 : index
    %c0_12 = arith.constant 0 : index
    %17 = vector.load %arg6[%c0_11, %c0_12] : memref<8x128xf32, #tpu.memory_space<vmem>>, vector<8x128xf32>
    tpu.vector_store %arg6[%c0_11, %c0_12], %16 {strides = array<i32>} : memref<8x128xf32, #tpu.memory_space<vmem>>, vector<8x128xf32>,
    return
  }
  func.func @transform_0(%arg0: i32) -> (i32, i32) {
    %c0_i32 = arith.constant 0 : i32
    %c0_i32_0 = arith.constant 0 : i32
    return %arg0, %c0_i32 : i32, i32
  }
  func.func @transform_1(%arg0: i32) -> (i32, i32) {
    %c0_i32 = arith.constant 0 : i32
    %c0_i32_0 = arith.constant 0 : i32
    %c0_i32_1 = arith.constant 0 : i32
    return %c0_i32, %c0_i32_0 : i32, i32
  }
  func.func @transform_2(%arg0: i32) -> (i32, i32) {
    %c0_i32 = arith.constant 0 : i32
    %c0_i32_0 = arith.constant 0 : i32
    %c0_i32_1 = arith.constant 0 : i32
    return %c0_i32, %c0_i32_0 : i32, i32
  }
  func.func @transform_3(%arg0: i32) -> (i32, i32) {
    %c0_i32 = arith.constant 0 : i32
    %c0_i32_0 = arith.constant 0 : i32
    %c0_i32_1 = arith.constant 0 : i32
    return %c0_i32, %c0_i32_0 : i32, i32
  }
  func.func @transform_4(%arg0: i32) -> (i32, i32) {
    %c0_i32 = arith.constant 0 : i32
    %c0_i32_0 = arith.constant 0 : i32
    %c0_i32_1 = arith.constant 0 : i32
    return %c0_i32, %c0_i32_0 : i32, i32
  }
  func.func @transform_5(%arg0: i32) -> (i32, i32) {
    %c0_i32 = arith.constant 0 : i32
    %c0_i32_0 = arith.constant 0 : i32
    return %arg0, %c0_i32 : i32, i32
  }
}

</mosaic_0001>

<llo_original>
// kernel: tpu_custom_call.1
$region0: #{tpu_custom_call.1}
  #allocation0 [shape = 'u32[]', space=smem, size = 0x4, offset = 0x4, fixed_abs, tag = 'smem constant byte address 0x4 - core index']
  #allocation1 [shape = 'u32[144,128]{1,0:T(1,128)}', space=vmem, size = 0x12000, scoped, tag = 'internal scratch']
  %s0 = inlined_call_operand.hbm [shape: f32[8,32], index: 0, kind: input, shape index: {}]
  %s1 = inlined_call_operand.hbm [shape: f32[32,64], index: 1, kind: input, shape index: {}]
  %s2 = inlined_call_operand.vmem [shape: f32[1,64], index: 2, kind: input, shape index: {}]
  %s3 = inlined_call_operand.hbm [shape: f32[64,128], index: 3, kind: input, shape index: {}]
  %s4 = inlined_call_operand.vmem [shape: f32[1,128], index: 4, kind: input, shape index: {}]
  %s5 = inlined_call_operand.hbm [shape: f32[8,128], index: 5, kind: output, shape index: {}]
  %s6 = sld [smem:[#allocation0]]
  $region42: #{tpu_custom_call.1} parent=0
    _
  %s8 = ssub.s32 1, %s6
  %s9 = scalar_select 0, %s8, %s6
  $region1: #{tpu_custom_call.1} parent=0
    #allocation2 [shape = 'u8[4096]{0}', space=vmem, size = 0x1000, scoped, tag = 'input window, operand 0, single buffered']
    #allocation3 [shape = 's32[1]{0}', space=sflag, size = 0x4, scoped, tag = 'scoped memory for tpu_custom_call.1']
    #allocation4 [shape = 's32[1]{0}', space=sflag, size = 0x4, scoped, tag = 'scoped memory for tpu_custom_call.1']
    #allocation5 [shape = 'u8[16384]{0}', space=vmem, size = 0x4000, scoped, tag = 'input window, operand 1, single buffered']
    #allocation6 [shape = 's32[1]{0}', space=sflag, size = 0x4, scoped, tag = 'scoped memory for tpu_custom_call.1']
    #allocation7 [shape = 'u8[32768]{0}', space=vmem, size = 0x8000, scoped, tag = 'input window, operand 3, single buffered']
    #allocation8 [shape = 'u8[4096]{0}', space=vmem, size = 0x1000, scoped, tag = 'output window, operand 0, single buffered']
    %10 = vsyncpa [#allocation3], 0
    %11 = vsyncpa [#allocation6], 0
    %12 = vsyncpa [#allocation4], 0
    // Predicated region
    $region2: #{tpu_custom_call.1} parent=1 // pred_check
      _
    $region3: #{tpu_custom_call.1} parent=1 // pred_check_branch
      %14 = sbr.rel (0) target = $region5
    $region4: #{tpu_custom_call.1} parent=1 // pred_region
      %s16 = ssub.s32 128, 128
      %17 = vsyncadd [#allocation3], %s16
      %s19 = sshll.u32 [#allocation2], 4
      %s20 = int_to_ptr.vmem [resolvable:$true] %s19
      %22 = dma.hbm_to_vmem [thread:$0]  %s0, 128, %s20, [#allocation3]
    $region5: #{tpu_custom_call.1} parent=1 // pred_fallthru
      _
    // Predicated region
    $region6: #{tpu_custom_call.1} parent=1 // pred_check
      _
    $region7: #{tpu_custom_call.1} parent=1 // pred_check_branch
      %24 = sbr.rel (0) target = $region9
    $region8: #{tpu_custom_call.1} parent=1 // pred_region
      %s26 = ssub.s32 512, 512
      %27 = vsyncadd [#allocation6], %s26
      %s28 = sshll.u32 [#allocation5], 4
      %s29 = int_to_ptr.vmem [resolvable:$true] %s28
      %34 = dma.hbm_to_vmem [thread:$0]  %s1, 512, %s29, [#allocation6], 128, 128, 8
    $region9: #{tpu_custom_call.1} parent=1 // pred_fallthru
      _
    // Predicated region
    $region10: #{tpu_custom_call.1} parent=1 // pred_check
      _
    $region11: #{tpu_custom_call.1} parent=1 // pred_check_branch
      %36 = sbr.rel (0) target = $region13
    $region12: #{tpu_custom_call.1} parent=1 // pred_region
      _
    $region13: #{tpu_custom_call.1} parent=1 // pred_fallthru
      _
    // Predicated region
    $region14: #{tpu_custom_call.1} parent=1 // pred_check
      _
    $region15: #{tpu_custom_call.1} parent=1 // pred_check_branch
      %38 = sbr.rel (0) target = $region17
    $region16: #{tpu_custom_call.1} parent=1 // pred_region
      %s40 = ssub.s32 1024, 1024
      %41 = vsyncadd [#allocation6], %s40
      %s42 = sshll.u32 [#allocation7], 4
      %s43 = int_to_ptr.vmem [resolvable:$true] %s42
      %48 = dma.hbm_to_vmem [thread:$0]  %s3, 1024, %s43, [#allocation6], 128, 128, 8
    $region17: #{tpu_custom_call.1} parent=1 // pred_fallthru
      _
    // Predicated region
    $region18: #{tpu_custom_call.1} parent=1 // pred_check
      _
    $region19: #{tpu_custom_call.1} parent=1 // pred_check_branch
      %50 = sbr.rel (0) target = $region21
    $region20: #{tpu_custom_call.1} parent=1 // pred_region
      _
    $region21: #{tpu_custom_call.1} parent=1 // pred_fallthru
      _
    // Predicated region
    $region22: #{tpu_custom_call.1} parent=1 // pred_check
      _
    $region23: #{tpu_custom_call.1} parent=1 // pred_check_branch
      %52 = sbr.rel (0) target = $region25
    $region24: #{tpu_custom_call.1} parent=1 // pred_region
      %53 = dma.done [#allocation3], 128
    $region25: #{tpu_custom_call.1} parent=1 // pred_fallthru
      _
    // Predicated region
    $region26: #{tpu_custom_call.1} parent=1 // pred_check
      _
    $region27: #{tpu_custom_call.1} parent=1 // pred_check_branch
      %55 = sbr.rel (0) target = $region29
    $region28: #{tpu_custom_call.1} parent=1 // pred_region
      %56 = dma.done [#allocation6], 512
    $region29: #{tpu_custom_call.1} parent=1 // pred_fallthru
      _
    // Predicated region
    $region30: #{tpu_custom_call.1} parent=1 // pred_check
      _
    $region31: #{tpu_custom_call.1} parent=1 // pred_check_branch
      %58 = sbr.rel (0) target = $region33
    $region32: #{tpu_custom_call.1} parent=1 // pred_region
      %59 = dma.done [#allocation6], 1024
    $region33: #{tpu_custom_call.1} parent=1 // pred_fallthru
      _
    %v61 = vld [vmem:[#allocation2] sm:$0xff]
    %v62 = vpack.c.bf16 %v61, %v61
    %v63 = vld [vmem:[#allocation5] sm:$0xff]
    %v64 = vld [vmem:[#allocation5 + $0x8] sm:$0xff]
    %v65 = vld [vmem:[#allocation5 + $0x10] sm:$0xff]
    %v66 = vld [vmem:[#allocation5 + $0x18] sm:$0xff]
    %v67 = vpack.c.bf16 %v64, %v63
    %v68 = vpack.c.bf16 %v66, %v65
    %v69 = vld [vmem:[%s2] sm:$0x1]
    %v71 = vlaneseq
    %v72 = vshrl.u32 %v71, 7
    %v73 = vsub.s32 0, %v72
    %v74 = vrot.slane %v69, %v73
    %vm76 = vcmask 261120
    %v78 = vsel %vm76, %v62, 0
    %80 = vmatprep.subr.bf16.mxu0 0
    %81 = vmatpush1.bf16.msra.mxu0 %v67
    %82 = vmatprep.subr.bf16.mxu0 0
    %83 = vmatpush1.bf16.msra.mxu0 %v68
    %84 = vmatprep.subr.bf16.mxu0 0
    %85 = vmatpush1.bf16.msra.mxu0 0
    %86 = vmatprep.subr.bf16.mxu0 0
    %87 = vmatpush1.bf16.msra.mxu0 0
    %88 = vmatprep.subr.bf16.mxu0 0
    %89 = vmatpush1.bf16.msra.mxu0 0
    %90 = vmatprep.subr.bf16.mxu0 0
    %91 = vmatpush1.bf16.msra.mxu0 0
    %92 = vmatprep.subr.bf16.mxu0 0
    %93 = vmatpush1.bf16.msra.mxu0 0
    %94 = vmatprep.subr.bf16.mxu0 0
    %95 = vmatpush1.bf16.msra.mxu0 0
    %96 = vmatprep.subr.bf16.mxu0 0
    %97 = vmatpush1.bf16.msra.mxu0 0
    %98 = vmatprep.subr.bf16.mxu0 0
    %99 = vmatpush1.bf16.msra.mxu0 0
    %100 = vmatprep.subr.bf16.mxu0 0
    %101 = vmatpush1.bf16.msra.mxu0 0
    %102 = vmatprep.subr.bf16.mxu0 0
    %103 = vmatpush1.bf16.msra.mxu0 0
    %104 = vmatprep.subr.bf16.mxu0 0
    %105 = vmatpush1.bf16.msra.mxu0 0
    %106 = vmatprep.subr.bf16.mxu0 0
    %107 = vmatpush1.bf16.msra.mxu0 0
    %108 = vmatprep.subr.bf16.mxu0 0
    %109 = vmatpush1.bf16.msra.mxu0 0
    %110 = vmatprep.subr.bf16.mxu0 0
    %111 = vmatpush1.bf16.msra.mxu0 0
    %112 = vmatprep.mubr.bf16.mxu0 0
    %113 = vmatmul.mubr.bf16.gmra.mrb[0].mxu0 %v78
    %v114 = vpop.f32.mrb[0].mxu0
    %v115 = vadd.f32 %v74, %v114
    %v116 = vpop.f32.mrb[0].mxu0
    %v117 = vpop.f32.mrb[0].mxu0
    %v118 = vpop.f32.mrb[0].mxu0
    %119 = vdwg.mxu0
    %v120 = vmax.f32 %v115, 0.0
    %v121 = vld [vmem:[#allocation7] sm:$0xff]
    %v122 = vld [vmem:[#allocation7 + $0x8] sm:$0xff]
    %v123 = vld [vmem:[#allocation7 + $0x10] sm:$0xff]
    %v124 = vld [vmem:[#allocation7 + $0x18] sm:$0xff]
    %v125 = vld [vmem:[#allocation7 + $0x20] sm:$0xff]
    %v126 = vld [vmem:[#allocation7 + $0x28] sm:$0xff]
    %v127 = vld [vmem:[#allocation7 + $0x30] sm:$0xff]
    %v128 = vld [vmem:[#allocation7 + $0x38] sm:$0xff]
    %v129 = vpack.c.bf16 %v122, %v121
    %v130 = vpack.c.bf16 %v124, %v123
    %v131 = vpack.c.bf16 %v126, %v125
    %v132 = vpack.c.bf16 %v128, %v127
    %v133 = vpack.c.bf16 %v120, %v120
    %v134 = vld [vmem:[%s4] sm:$0x1]
    %v136 = vlaneseq
    %v137 = vshrl.u32 %v136, 7
    %v138 = vsub.s32 0, %v137
    %v139 = vrot.slane %v134, %v138
    %vm141 = vcmask 523264
    %v143 = vsel %vm141, %v133, 0
    %145 = vmatprep.subr.bf16.mxu0 0
    %146 = vmatpush1.bf16.msra.mxu0 %v129
    %147 = vmatprep.subr.bf16.mxu0 0
    %148 = vmatpush1.bf16.msra.mxu0 %v130
    %149 = vmatprep.subr.bf16.mxu0 0
    %150 = vmatpush1.bf16.msra.mxu0 %v131
    %151 = vmatprep.subr.bf16.mxu0 0
    %152 = vmatpush1.bf16.msra.mxu0 %v132
    %153 = vmatprep.subr.bf16.mxu0 0
    %154 = vmatpush1.bf16.msra.mxu0 0
    %155 = vmatprep.subr.bf16.mxu0 0
    %156 = vmatpush1.bf16.msra.mxu0 0
    %157 = vmatprep.subr.bf16.mxu0 0
    %158 = vmatpush1.bf16.msra.mxu0 0
    %159 = vmatprep.subr.bf16.mxu0 0
    %160 = vmatpush1.bf16.msra.mxu0 0
    %161 = vmatprep.subr.bf16.mxu0 0
    %162 = vmatpush1.bf16.msra.mxu0 0
    %163 = vmatprep.subr.bf16.mxu0 0
    %164 = vmatpush1.bf16.msra.mxu0 0
    %165 = vmatprep.subr.bf16.mxu0 0
    %166 = vmatpush1.bf16.msra.mxu0 0
    %167 = vmatprep.subr.bf16.mxu0 0
    %168 = vmatpush1.bf16.msra.mxu0 0
    %169 = vmatprep.subr.bf16.mxu0 0
    %170 = vmatpush1.bf16.msra.mxu0 0
    %171 = vmatprep.subr.bf16.mxu0 0
    %172 = vmatpush1.bf16.msra.mxu0 0
    %173 = vmatprep.subr.bf16.mxu0 0
    %174 = vmatpush1.bf16.msra.mxu0 0
    %175 = vmatprep.subr.bf16.mxu0 0
    %176 = vmatpush1.bf16.msra.mxu0 0
    %177 = vmatprep.mubr.bf16.mxu0 0
    %178 = vmatmul.mubr.bf16.gmra.mrb[0].mxu0 %v143
    %v179 = vpop.f32.mrb[0].mxu0
    %v180 = vadd.f32 %v139, %v179
    %v181 = vpop.f32.mrb[0].mxu0
    %v182 = vpop.f32.mrb[0].mxu0
    %v183 = vpop.f32.mrb[0].mxu0
    %184 = vdwg.mxu0
    %185 = vst [vmem:[#allocation8] sm:$0xff] %v180
    // Predicated region
    $region34: #{tpu_custom_call.1} parent=1 // pred_check
      _
    $region35: #{tpu_custom_call.1} parent=1 // pred_check_branch
      %187 = sbr.rel (0) target = $region37
    $region36: #{tpu_custom_call.1} parent=1 // pred_region
      %s189 = ssub.s32 128, 128
      %190 = vsyncadd [#allocation4], %s189
      %s192 = sshll.u32 [#allocation8], 4
      %s193 = int_to_ptr.vmem [resolvable:$true] %s192
      %195 = dma.vmem_to_hbm [thread:$0]  %s193, 128, %s5, [#allocation4]
    $region37: #{tpu_custom_call.1} parent=1 // pred_fallthru
      _
    // Predicated region
    $region38: #{tpu_custom_call.1} parent=1 // pred_check
      _
    $region39: #{tpu_custom_call.1} parent=1 // pred_check_branch
      %197 = sbr.rel (0) target = $region41
    $region40: #{tpu_custom_call.1} parent=1 // pred_region
      %198 = dma.done [#allocation4], 128
    $region41: #{tpu_custom_call.1} parent=1 // pred_fallthru
      _
    %199 = vsyncpa [#allocation3], 1
    %200 = vsyncpa [#allocation6], 1
    %201 = vsyncpa [#allocation4], 1

</llo_original>
